<compile_context>
chip_gen: v7x
topology: tpu7x:2x2x1
jax: 0.10.0
libtpu: 0.0.40
codegen_flags: <defaults>
</compile_context>

<pallas_src>
import jax
import jax.numpy as jnp
from jax.experimental import pallas as pl
from jax.experimental.pallas import tpu as pltpu


def continuous_head_kernel(x_ref, w_ref, b_ref, eps_ref, action_ref, probs_ref):
    # x_ref:      (B, D0)
    # w_ref:      (D0, 2A)  columns [0:A] = mu Linear (pre-transposed),
    #                       columns [A:2A] = var Linear (pre-transposed)
    # b_ref:      (1, 2A)   fused biases
    # eps_ref:    (B, A)    standard-normal noise for Normal(mu, std).sample()
    # action_ref: (B, A)
    # probs_ref:  (B, 2A)   = cat([mu, var], dim=1)
    A = action_ref.shape[-1]

    x = x_ref[...]
    # one fused matmul producing both branches (mu | var)
    z = jnp.dot(x, w_ref[...], preferred_element_type=jnp.float32) + b_ref[...]

    z_mu = z[:, :A]
    z_var = z[:, A:]

    mu = jnp.tanh(z_mu)
    # numerically stable softplus: log(1+exp(t)) = max(t, 0) + log(1 + exp(-|t|))
    var = jnp.maximum(z_var, 0.0) + jnp.log(1.0 + jnp.exp(-jnp.abs(z_var)))

    std = jnp.maximum(jnp.sqrt(var), 0.001)          # torch: .sqrt().clamp(min=0.001)
    action_ref[...] = (mu + std * eps_ref[...]).astype(action_ref.dtype)
    probs_ref[...] = jnp.concatenate([mu, var], axis=-1).astype(probs_ref.dtype)


def continuous_head_forward(x, params, sample_key):
    """Full ContinuousHead.forward. Returns (action (B, A), probs (B, 2A))."""
    w_all, b_all = params                       # (D0, 2A), (1, 2A): fused, pre-transposed
    B, _ = x.shape
    A = w_all.shape[1] // 2

    # TODO(synk): the standard-normal noise is drawn with jax.random in the wrapper;
    # the reparameterized transform mu + std*eps is fused in-kernel. A fully in-kernel
    # sampler would use pltpu.prng_seed + pltpu.stateful_normal.
    eps = jax.random.normal(sample_key, (B, A), jnp.float32)

    vmem = pltpu.MemorySpace.VMEM
    action, probs = pl.pallas_call(
        continuous_head_kernel,
        out_shape=(
            jax.ShapeDtypeStruct((B, A), jnp.float32),
            jax.ShapeDtypeStruct((B, 2 * A), jnp.float32),
        ),
        in_specs=[
            pl.BlockSpec(memory_space=vmem),   # x
            pl.BlockSpec(memory_space=vmem),   # w_all
            pl.BlockSpec(memory_space=vmem),   # b_all
            pl.BlockSpec(memory_space=vmem),   # eps
        ],
        out_specs=(
            pl.BlockSpec(memory_space=vmem),   # action
            pl.BlockSpec(memory_space=vmem),   # probs
        ),
    )(x, w_all, b_all, eps)
    return action, probs


# --- static helpers of the module (plain jnp; no kernel needed) -------------

def continuous_head_log_prob(probs, actions):
    dim = probs.shape[1]
    mu, var = probs[:, : dim // 2], probs[:, dim // 2:]
    p1 = -(actions - mu) ** 2 / (2.0 * jnp.maximum(var, 0.001))
    p2 = -jnp.log(jnp.sqrt(2.0 * jnp.pi * var))
    return p1 + p2


def continuous_head_entropy(probs):
    dim = probs.shape[1]
    var = probs[:, dim // 2:]
    return jnp.mean(-(jnp.log(2.0 * jnp.pi * var) + 1.0) / 2.0)


def init_params(key, input_dim, action_dim):
    """Mirrors ContinuousHead.__init__ with init_uniform(layer, 0.03):
    weights ~ U(-0.03, 0.03), zero biases. Stored fused and pre-transposed
    as (D0, 2A): columns [:A] = mu Linear, columns [A:] = var Linear."""
    k_mu, k_var = jax.random.split(key, 2)
    w_mu = jax.random.uniform(k_mu, (action_dim, input_dim), jnp.float32, -0.03, 0.03)
    w_var = jax.random.uniform(k_var, (action_dim, input_dim), jnp.float32, -0.03, 0.03)
    w_all = jnp.concatenate([w_mu.T, w_var.T], axis=1)       # (D0, 2A)
    b_all = jnp.zeros((1, 2 * action_dim), jnp.float32)
    return w_all, b_all


if __name__ == "__main__":
    input_dim, action_dim = 32, 8
    batch = 4

    root = jax.random.PRNGKey(0)
    k_x, k_params, k_sample = jax.random.split(root, 3)

    x = jax.random.normal(k_x, (batch, input_dim), jnp.float32)
    params = init_params(k_params, input_dim, action_dim)

    action, probs = continuous_head_forward(x, params, k_sample)
    jax.block_until_ready((action, probs))

    # pure-JAX reference using the same eps (fully deterministic check)
    w_all, b_all = params
    eps = jax.random.normal(k_sample, (batch, action_dim), jnp.float32)
    z = x @ w_all + b_all
    mu_ref = jnp.tanh(z[:, :action_dim])
    var_ref = jax.nn.softplus(z[:, action_dim:])
    std_ref = jnp.maximum(jnp.sqrt(var_ref), 0.001)
    action_exp = mu_ref + std_ref * eps
    probs_exp = jnp.concatenate([mu_ref, var_ref], axis=1)

    assert action.shape == (batch, action_dim)
    assert probs.shape == (batch, 2 * action_dim)
    assert jnp.allclose(probs, probs_exp, atol=1e-5)
    assert jnp.allclose(action, action_exp, atol=1e-5)
    # sanity: tanh range and non-negative variance
    assert jnp.all(jnp.abs(probs[:, :action_dim]) <= 1.0)
    assert jnp.all(probs[:, action_dim:] >= 0.0)

    # exercise the static helpers too
    lp = continuous_head_log_prob(probs, action)
    ent = continuous_head_entropy(probs)
    jax.block_until_ready((lp, ent))

    print("KERNEL_OK")
</pallas_src>

<mosaic_0001>
module attributes {stable_mosaic.version = 11 : i64} {
  func.func @continuous_head_kernel(%arg0: memref<4x32xf32, #tpu.memory_space<vmem>>, %arg1: memref<32x16xf32, #tpu.memory_space<vmem>>, %arg2: memref<1x16xf32, #tpu.memory_space<vmem>>, %arg3: memref<4x8xf32, #tpu.memory_space<vmem>>, %arg4: memref<4x8xf32, #tpu.memory_space<vmem>>, %arg5: memref<4x16xf32, #tpu.memory_space<vmem>>) attributes {dimension_semantics = [], scalar_prefetch = 0 : i64, scratch_operands = 0 : i64, tpu.core_type = #tpu.core_type<tc>} {
    %c0 = arith.constant 0 : index
    %c0_0 = arith.constant 0 : index
    %0 = vector.load %arg0[%c0, %c0_0] : memref<4x32xf32, #tpu.memory_space<vmem>>, vector<4x32xf32>
    %c0_1 = arith.constant 0 : index
    %c0_2 = arith.constant 0 : index
    %1 = vector.load %arg1[%c0_1, %c0_2] : memref<32x16xf32, #tpu.memory_space<vmem>>, vector<32x16xf32>
    %cst = arith.constant dense<0.000000e+00> : vector<4x16xf32>
    %2 = tpu.matmul %0, %1, %cst {dimension_numbers = #tpu.dot_dimension_numbers<[1], [0], [0], [1], [0, 0, 1, 1], [], []>} : vector<4x32xf32>, vector<32x16xf32>, vector<4x16xf32> -> vector<4x16xf32>
    %c0_3 = arith.constant 0 : index
    %c0_4 = arith.constant 0 : index
    %3 = vector.load %arg2[%c0_3, %c0_4] : memref<1x16xf32, #tpu.memory_space<vmem>>, vector<1x16xf32>
    %4 = vector.broadcast %3 : vector<1x16xf32> to vector<4x16xf32>
    %5 = arith.addf %2, %4 : vector<4x16xf32>
    %6 = vector.extract_strided_slice %5 {offsets = [0, 0], sizes = [4, 8], strides = [1, 1]} : vector<4x16xf32> to vector<4x8xf32>
    %7 = vector.extract_strided_slice %5 {offsets = [0, 8], sizes = [4, 8], strides = [1, 1]} : vector<4x16xf32> to vector<4x8xf32>
    %8 = math.tanh %6 : vector<4x8xf32>
    %cst_5 = arith.constant 0.000000e+00 : f32
    %9 = vector.broadcast %cst_5 : f32 to vector<4x8xf32>
    %10 = arith.maximumf %7, %9 : vector<4x8xf32>
    %11 = math.absf %7 : vector<4x8xf32>
    %cst_6 = arith.constant 0.000000e+00 : f32
    %12 = vector.broadcast %cst_6 : f32 to vector<4x8xf32>
    %13 = arith.subf %12, %11 : vector<4x8xf32>
    %14 = math.exp %13 : vector<4x8xf32>
    %cst_7 = arith.constant 1.000000e+00 : f32
    %15 = vector.broadcast %cst_7 : f32 to vector<4x8xf32>
    %16 = arith.addf %15, %14 : vector<4x8xf32>
    %17 = math.log %16 : vector<4x8xf32>
    %18 = arith.addf %10, %17 : vector<4x8xf32>
    %19 = math.sqrt %18 : vector<4x8xf32>
    %cst_8 = arith.constant 1.000000e-03 : f32
    %20 = vector.broadcast %cst_8 : f32 to vector<4x8xf32>
    %21 = arith.maximumf %19, %20 : vector<4x8xf32>
    %c0_9 = arith.constant 0 : index
    %c0_10 = arith.constant 0 : index
    %22 = vector.load %arg3[%c0_9, %c0_10] : memref<4x8xf32, #tpu.memory_space<vmem>>, vector<4x8xf32>
    %23 = arith.mulf %21, %22 : vector<4x8xf32>
    %24 = arith.addf %8, %23 : vector<4x8xf32>
    %c0_11 = arith.constant 0 : index
    %c0_12 = arith.constant 0 : index
    %25 = vector.load %arg4[%c0_11, %c0_12] : memref<4x8xf32, #tpu.memory_space<vmem>>, vector<4x8xf32>
    tpu.vector_store %arg4[%c0_11, %c0_12], %24 {strides = array<i32>} : memref<4x8xf32, #tpu.memory_space<vmem>>, vector<4x8xf32>,
    %26 = tpu.concatenate %8, %18 in 1 : vector<4x8xf32>, vector<4x8xf32> -> vector<4x16xf32>
    %c0_13 = arith.constant 0 : index
    %c0_14 = arith.constant 0 : index
    %27 = vector.load %arg5[%c0_13, %c0_14] : memref<4x16xf32, #tpu.memory_space<vmem>>, vector<4x16xf32>
    tpu.vector_store %arg5[%c0_13, %c0_14], %26 {strides = array<i32>} : memref<4x16xf32, #tpu.memory_space<vmem>>, vector<4x16xf32>,
    return
  }
}

</mosaic_0001>

<llo_original>
// kernel: tpu_custom_call.1
$region0: #{tpu_custom_call.1}
  #allocation0 [shape = 'u32[]', space=smem, size = 0x4, offset = 0x4, fixed_abs, tag = 'smem constant byte address 0x4 - core index']
  #allocation1 [shape = 'u32[144,128]{1,0:T(1,128)}', space=vmem, size = 0x12000, scoped, tag = 'internal scratch']
  %s0 = inlined_call_operand.vmem [shape: f32[4,32], index: 0, kind: input, shape index: {}]
  %s1 = inlined_call_operand.vmem [shape: f32[32,16], index: 1, kind: input, shape index: {}]
  %s2 = inlined_call_operand.vmem [shape: f32[1,16], index: 2, kind: input, shape index: {}]
  %s3 = inlined_call_operand.vmem [shape: f32[4,8], index: 3, kind: input, shape index: {}]
  %s4 = inlined_call_operand.hbm [shape: f32[4,8], index: 4, kind: output, shape index: {0}]
  %s5 = inlined_call_operand.hbm [shape: f32[4,16], index: 5, kind: output, shape index: {1}]
  %6 = xla_tuple %s4, %s5
  %s7 = sld [smem:[#allocation0]]
  $region34: #{tpu_custom_call.1} parent=0
    _
  %s9 = ssub.s32 1, %s7
  %s10 = scalar_select 0, %s9, %s7
  $region1: #{tpu_custom_call.1} parent=0
    #allocation2 [shape = 'u8[2048]{0}', space=vmem, size = 0x800, scoped, tag = 'output window, operand 0, single buffered']
    #allocation3 [shape = 's32[1]{0}', space=sflag, size = 0x4, scoped, tag = 'scoped memory for tpu_custom_call.1']
    #allocation4 [shape = 'u8[2048]{0}', space=vmem, size = 0x800, scoped, tag = 'output window, operand 1, single buffered']
    #allocation5 [shape = 's32[1]{0}', space=sflag, size = 0x4, scoped, tag = 'scoped memory for tpu_custom_call.1']
    %11 = vsyncpa [#allocation3], 0
    %12 = vsyncpa [#allocation5], 0
    // Predicated region
    $region2: #{tpu_custom_call.1} parent=1 // pred_check
      _
    $region3: #{tpu_custom_call.1} parent=1 // pred_check_branch
      %14 = sbr.rel (0) target = $region5
    $region4: #{tpu_custom_call.1} parent=1 // pred_region
      _
    $region5: #{tpu_custom_call.1} parent=1 // pred_fallthru
      _
    // Predicated region
    $region6: #{tpu_custom_call.1} parent=1 // pred_check
      _
    $region7: #{tpu_custom_call.1} parent=1 // pred_check_branch
      %16 = sbr.rel (0) target = $region9
    $region8: #{tpu_custom_call.1} parent=1 // pred_region
      _
    $region9: #{tpu_custom_call.1} parent=1 // pred_fallthru
      _
    // Predicated region
    $region10: #{tpu_custom_call.1} parent=1 // pred_check
      _
    $region11: #{tpu_custom_call.1} parent=1 // pred_check_branch
      %18 = sbr.rel (0) target = $region13
    $region12: #{tpu_custom_call.1} parent=1 // pred_region
      _
    $region13: #{tpu_custom_call.1} parent=1 // pred_fallthru
      _
    // Predicated region
    $region14: #{tpu_custom_call.1} parent=1 // pred_check
      _
    $region15: #{tpu_custom_call.1} parent=1 // pred_check_branch
      %20 = sbr.rel (0) target = $region17
    $region16: #{tpu_custom_call.1} parent=1 // pred_region
      _
    $region17: #{tpu_custom_call.1} parent=1 // pred_fallthru
      _
    %v21 = vld [vmem:[%s0] sm:$0xf]
    %v22 = vld [vmem:[%s1] sm:$0xff]
    %v23 = vld [vmem:[%s1 + $0x8] sm:$0xff]
    %v24 = vld [vmem:[%s1 + $0x10] sm:$0xff]
    %v25 = vld [vmem:[%s1 + $0x18] sm:$0xff]
    %v26 = vld [vmem:[%s2] sm:$0x1]
    %v28 = vlaneseq
    %v29 = vshrl.u32 %v28, 7
    %v30 = vsub.s32 0, %v29
    %v31 = vrot.slane %v26, %v30
    %vm33 = vcmask 261120
    %v35 = vsel %vm33, %v21, 0
    %37 = vmatprep.subr.mxu0 0.0
    %38 = vmatpush1.msra.mxu0 %v22
    %39 = vmatprep.subr.mxu0 0.0
    %40 = vmatpush1.msra.mxu0 %v23
    %41 = vmatprep.subr.mxu0 0.0
    %42 = vmatpush1.msra.mxu0 %v24
    %43 = vmatprep.subr.mxu0 0.0
    %44 = vmatpush1.msra.mxu0 %v25
    %45 = vmatprep.subr.mxu0 0.0
    %46 = vmatpush1.msra.mxu0 0.0
    %47 = vmatprep.subr.mxu0 0.0
    %48 = vmatpush1.msra.mxu0 0.0
    %49 = vmatprep.subr.mxu0 0.0
    %50 = vmatpush1.msra.mxu0 0.0
    %51 = vmatprep.subr.mxu0 0.0
    %52 = vmatpush1.msra.mxu0 0.0
    %53 = vmatprep.subr.mxu0 0.0
    %54 = vmatpush1.msra.mxu0 0.0
    %55 = vmatprep.subr.mxu0 0.0
    %56 = vmatpush1.msra.mxu0 0.0
    %57 = vmatprep.subr.mxu0 0.0
    %58 = vmatpush1.msra.mxu0 0.0
    %59 = vmatprep.subr.mxu0 0.0
    %60 = vmatpush1.msra.mxu0 0.0
    %61 = vmatprep.subr.mxu0 0.0
    %62 = vmatpush1.msra.mxu0 0.0
    %63 = vmatprep.subr.mxu0 0.0
    %64 = vmatpush1.msra.mxu0 0.0
    %65 = vmatprep.subr.mxu0 0.0
    %66 = vmatpush1.msra.mxu0 0.0
    %67 = vmatprep.subr.mxu0 0.0
    %68 = vmatpush1.msra.mxu0 0.0
    %69 = vmatprep.subr.mxu0 0.0
    %70 = vmatpush1.msra.mxu0 0.0
    %71 = vmatprep.subr.mxu0 0.0
    %72 = vmatpush1.msra.mxu0 0.0
    %73 = vmatprep.subr.mxu0 0.0
    %74 = vmatpush1.msra.mxu0 0.0
    %75 = vmatprep.subr.mxu0 0.0
    %76 = vmatpush1.msra.mxu0 0.0
    %77 = vmatprep.subr.mxu0 0.0
    %78 = vmatpush1.msra.mxu0 0.0
    %79 = vmatprep.subr.mxu0 0.0
    %80 = vmatpush1.msra.mxu0 0.0
    %81 = vmatprep.subr.mxu0 0.0
    %82 = vmatpush1.msra.mxu0 0.0
    %83 = vmatprep.subr.mxu0 0.0
    %84 = vmatpush1.msra.mxu0 0.0
    %85 = vmatprep.subr.mxu0 0.0
    %86 = vmatpush1.msra.mxu0 0.0
    %87 = vmatprep.subr.mxu0 0.0
    %88 = vmatpush1.msra.mxu0 0.0
    %89 = vmatprep.subr.mxu0 0.0
    %90 = vmatpush1.msra.mxu0 0.0
    %91 = vmatprep.subr.mxu0 0.0
    %92 = vmatpush1.msra.mxu0 0.0
    %93 = vmatprep.subr.mxu0 0.0
    %94 = vmatpush1.msra.mxu0 0.0
    %95 = vmatprep.subr.mxu0 0.0
    %96 = vmatpush1.msra.mxu0 0.0
    %97 = vmatprep.subr.mxu0 0.0
    %98 = vmatpush1.msra.mxu0 0.0
    %99 = vmatprep.subr.mxu0 0.0
    %100 = vmatpush1.msra.mxu0 0.0
    %101 = vmatprep.mubr.f32.mxu0 0.0
    %102 = vmatmul.mubr.f32.gmra.mrb[0].mxu0 %v35
    %v103 = vpop.f32.mrb[0].mxu0
    %v104 = vadd.f32 %v31, %v103
    %v105 = vpop.f32.mrb[0].mxu0
    %106 = vdwg.mxu0
    %v107 = vtanh.pop %v104
    %v108 = vmax.f32 %v104, 0.0
    %v109 = vand.u32 2147483647, %v104
    %v110 = vsub.f32 0.0, %v109
    %v111 = vmul.f32 %v110, 1.442695
    %v112 = vpow.pop %v111
    %v113 = vadd.f32 %v112, 1.0
    %v114 = vlog2.pop %v113
    %v115 = vmul.f32 %v114, 0.6931472
    %v116 = vadd.f32 %v108, %v115
    %v117 = vrsqrt.pop %v116
    %v118 = vmul.f32 %v116, %v117
    %vm119 = vcmp.eq.f32.partialorder %v116, inf
    %v120 = vsel %vm119, %v116, %v118
    %vm121 = vcmp.eq.f32.partialorder %v116, 0.0
    %v122 = vand.u32 %v116, 2147483648
    %v123 = vsel %vm121, %v122, %v120
    %v124 = vmax.f32 %v123, 0.001
    %v125 = vld [vmem:[%s3] sm:$0xf]
    %127 = vrot.lane.b32.xlu0 %v125, 8
    %v128 = vpop.permute.xlu0 %127
    %v130 = vmul.f32 %v124, %v128
    %132 = vrot.lane.b32.xlu0 %v130, 120
    %v133 = vpop.permute.xlu0 %132
    %v135 = vadd.f32 %v107, %v133
    %vm136 = vcmask 60416
    %137 = vst.msk [vmem:[#allocation2] sm:$0xf] %vm136, %v135
    %vm138 = vcmask 64512
    %v139 = vsel %vm138, %v107, %v116
    %vm140 = vcmask 125952
    %141 = vst.msk [vmem:[#allocation4] sm:$0xf] %vm140, %v139
    // Predicated region
    $region18: #{tpu_custom_call.1} parent=1 // pred_check
      _
    $region19: #{tpu_custom_call.1} parent=1 // pred_check_branch
      %143 = sbr.rel (0) target = $region21
    $region20: #{tpu_custom_call.1} parent=1 // pred_region
      %s145 = ssub.s32 64, 64
      %146 = vsyncadd [#allocation3], %s145
      %s148 = sshll.u32 [#allocation2], 4
      %s149 = int_to_ptr.vmem [resolvable:$true] %s148
      %151 = dma.vmem_to_hbm [thread:$0]  %s149, 64, %s4, [#allocation3]
    $region21: #{tpu_custom_call.1} parent=1 // pred_fallthru
      _
    // Predicated region
    $region22: #{tpu_custom_call.1} parent=1 // pred_check
      _
    $region23: #{tpu_custom_call.1} parent=1 // pred_check_branch
      %153 = sbr.rel (0) target = $region25
    $region24: #{tpu_custom_call.1} parent=1 // pred_region
      %s155 = ssub.s32 64, 64
      %156 = vsyncadd [#allocation5], %s155
      %s158 = sshll.u32 [#allocation4], 4
      %s159 = int_to_ptr.vmem [resolvable:$true] %s158
      %161 = dma.vmem_to_hbm [thread:$0]  %s159, 64, %s5, [#allocation5]
    $region25: #{tpu_custom_call.1} parent=1 // pred_fallthru
      _
    // Predicated region
    $region26: #{tpu_custom_call.1} parent=1 // pred_check
      _
    $region27: #{tpu_custom_call.1} parent=1 // pred_check_branch
      %163 = sbr.rel (0) target = $region29
    $region28: #{tpu_custom_call.1} parent=1 // pred_region
      %164 = dma.done [#allocation3], 64
    $region29: #{tpu_custom_call.1} parent=1 // pred_fallthru
      _
    // Predicated region
    $region30: #{tpu_custom_call.1} parent=1 // pred_check
      _
    $region31: #{tpu_custom_call.1} parent=1 // pred_check_branch
      %166 = sbr.rel (0) target = $region33
    $region32: #{tpu_custom_call.1} parent=1 // pred_region
      %167 = dma.done [#allocation5], 64
    $region33: #{tpu_custom_call.1} parent=1 // pred_fallthru
      _
    %168 = vsyncpa [#allocation3], 1
    %169 = vsyncpa [#allocation5], 1

</llo_original>
